<compile_context>
chip_gen: v7x
topology: tpu7x:2x2x1
jax: 0.10.0
libtpu: 0.0.40
codegen_flags: <defaults>
</compile_context>

<pallas_src>
import math
import functools

import jax
import jax.numpy as jnp
from jax import lax
from jax.experimental import pallas as pl
from jax.experimental.pallas import tpu as pltpu


# ----------------------------------------------------------------------------
# Small helpers
# ----------------------------------------------------------------------------
def _nb(shape, dtype):
    return int(math.prod(shape)) * jnp.dtype(dtype).itemsize


def _row_tile(n, max_tile=512):
    """Largest row tile <= max_tile that evenly divides n (else the full n)."""
    if n <= max_tile:
        return n
    for cand in (max_tile, 256, 128, 64, 32, 16, 8):
        if n % cand == 0:
            return cand
    return n


def _mosaic_params(semantics, block_bytes):
    """Explicit scoped-VMEM limit: 2x (double-buffered pipeline) + slack,
    floored for Mosaic internal scratch, capped under v7x physical VMEM."""
    limit = int(min(max(2 * block_bytes + (4 << 20), 16 << 20), 60 << 20))
    return pltpu.CompilerParams(dimension_semantics=semantics,
                                vmem_limit_bytes=limit)


# ----------------------------------------------------------------------------
# Kernels
# ----------------------------------------------------------------------------
def _layernorm_f32(x, a, b):
    """torch-style LayerNorm: a * (x - mean) / (std_unbiased + 1e-6) + b,
    with the per-row divide replaced by a per-row reciprocal."""
    h = x.shape[-1]
    mean = jnp.mean(x, axis=-1, keepdims=True)
    diff = x - mean
    var = jnp.sum(diff * diff, axis=-1, keepdims=True) * (1.0 / (h - 1))
    std = jnp.sqrt(var)
    inv = pl.reciprocal(std + 1e-6)          # [tm,1] instead of an H-wide divide
    return a * diff * inv + b


def ln_matmul_kernel(x_ref, a_ref, b_ref, w_ref, bias_ref, o_ref):
    """Fused LayerNorm + Linear (bf16 MXU operands, f32 accumulation)."""
    x = x_ref[...].astype(jnp.float32)                       # [tm, H]
    ln = _layernorm_f32(x, a_ref[...], b_ref[...])
    y = jnp.dot(ln.astype(jnp.bfloat16), w_ref[...],
                preferred_element_type=jnp.float32) + bias_ref[...]
    o_ref[...] = y.astype(o_ref.dtype)


def matmul_kernel(x_ref, w_ref, bias_ref, o_ref):
    """Plain Linear over one row slab (memory K/V projection)."""
    y = jnp.dot(x_ref[...].astype(jnp.bfloat16), w_ref[...],
                preferred_element_type=jnp.float32) + bias_ref[...]
    o_ref[...] = y.astype(o_ref.dtype)


def matmul_residual_kernel(x_ref, w_ref, bias_ref, r_ref, o_ref):
    """Linear + fused residual add (attention output projection)."""
    y = jnp.dot(x_ref[...].astype(jnp.bfloat16), w_ref[...],
                preferred_element_type=jnp.float32) + bias_ref[...]
    o_ref[...] = (r_ref[...].astype(jnp.float32) + y).astype(o_ref.dtype)


def ln_ffn_residual_kernel(x_ref, a_ref, b_ref, w1_ref, b1_ref, w2_ref, b2_ref,
                           o_ref):
    """Fused LayerNorm + Linear + ReLU + Linear + residual (x is residual)."""
    x = x_ref[...].astype(jnp.float32)                       # [tm, H]
    ln = _layernorm_f32(x, a_ref[...], b_ref[...])
    h1 = jnp.dot(ln.astype(jnp.bfloat16), w1_ref[...],
                 preferred_element_type=jnp.float32) + b1_ref[...]
    h1 = jnp.maximum(h1, 0.0)
    y = jnp.dot(h1.astype(jnp.bfloat16), w2_ref[...],
                preferred_element_type=jnp.float32) + b2_ref[...]
    o_ref[...] = (x + y).astype(o_ref.dtype)
    # TODO(synk): for large DFF, make DFF a grid axis ("arbitrary") with a
    #             [tm,H] f32 VMEM accumulator and pl.when init/finalize.


def attn_kernel(q_ref, k_ref, v_ref, bias_ref, o_ref, *, num_heads):
    """Multi-head attention for one (batch, Tq-tile) step, row-major layout.

    q_ref: [1, tq, H]  k_ref/v_ref: [1, Tk, H]  bias_ref: [1, tq, Tk] (additive)
    1/sqrt(dk) is already folded into the Q projection weights.
    Heads are processed with static lane slices; output is written as a single
    lane-dense [tq, H] slab (head-contiguous, matching torch's reshape).
    """
    q = q_ref[0]                                             # [tq, H] f32
    k = k_ref[0]                                             # [Tk, H] f32
    v = v_ref[0]                                             # [Tk, H] f32
    bias = bias_ref[0].astype(jnp.float32)                   # [tq, Tk]
    h = q.shape[-1]
    dk = h // num_heads
    outs = []
    for j in range(num_heads):
        sl = slice(j * dk, (j + 1) * dk)
        qh = q[:, sl].astype(jnp.bfloat16)
        kh = k[:, sl].astype(jnp.bfloat16)
        vh = v[:, sl].astype(jnp.bfloat16)
        s = lax.dot_general(qh, kh, (((1,), (1,)), ((), ())),
                            preferred_element_type=jnp.float32)
        s = s + bias
        s = s - jnp.max(s, axis=-1, keepdims=True)
        p = jnp.exp(s)
        denom = jnp.sum(p, axis=-1, keepdims=True)
        p = p * pl.reciprocal(denom, approx=True)            # EUP, off VALU path
        outs.append(jnp.dot(p.astype(jnp.bfloat16), vh,
                            preferred_element_type=jnp.float32))
    o_ref[0] = jnp.concatenate(outs, axis=-1).astype(o_ref.dtype)
    # TODO(synk): flash-style online softmax over Tk tiles for long sequences.


# ----------------------------------------------------------------------------
# Wrappers
# ----------------------------------------------------------------------------
def ln_matmul(x2d, a, b, w, bias):
    n, h = x2d.shape
    dout = w.shape[1]
    tm = _row_tile(n)
    blk = (_nb((tm, h), x2d.dtype) + 2 * _nb((1, h), jnp.float32)
           + _nb((h, dout), w.dtype) + _nb((1, dout), jnp.float32)
           + _nb((tm, dout), x2d.dtype))
    cost = pl.CostEstimate(
        flops=int(2 * n * h * dout + 8 * n * h),
        transcendentals=int(2 * n),
        bytes_accessed=int(_nb((n, h), x2d.dtype) + _nb((h, dout), w.dtype)
                           + _nb((n, dout), x2d.dtype)))
    return pl.pallas_call(
        ln_matmul_kernel,
        out_shape=jax.ShapeDtypeStruct((n, dout), x2d.dtype),
        grid=(pl.cdiv(n, tm),),
        in_specs=[pl.BlockSpec((tm, h), lambda i: (i, 0)),
                  pl.BlockSpec((1, h), lambda i: (0, 0)),
                  pl.BlockSpec((1, h), lambda i: (0, 0)),
                  pl.BlockSpec((h, dout), lambda i: (0, 0)),
                  pl.BlockSpec((1, dout), lambda i: (0, 0))],
        out_specs=pl.BlockSpec((tm, dout), lambda i: (i, 0)),
        compiler_params=_mosaic_params(("parallel",), blk),
        cost_estimate=cost,
    )(x2d, a.reshape(1, h), b.reshape(1, h), w, bias.reshape(1, dout))


def matmul(x2d, w, bias):
    n, din = x2d.shape
    dout = w.shape[1]
    tm = _row_tile(n)
    blk = (_nb((tm, din), x2d.dtype) + _nb((din, dout), w.dtype)
           + _nb((1, dout), jnp.float32) + _nb((tm, dout), x2d.dtype))
    cost = pl.CostEstimate(
        flops=int(2 * n * din * dout), transcendentals=0,
        bytes_accessed=int(_nb((n, din), x2d.dtype) + _nb((din, dout), w.dtype)
                           + _nb((n, dout), x2d.dtype)))
    return pl.pallas_call(
        matmul_kernel,
        out_shape=jax.ShapeDtypeStruct((n, dout), x2d.dtype),
        grid=(pl.cdiv(n, tm),),
        in_specs=[pl.BlockSpec((tm, din), lambda i: (i, 0)),
                  pl.BlockSpec((din, dout), lambda i: (0, 0)),
                  pl.BlockSpec((1, dout), lambda i: (0, 0))],
        out_specs=pl.BlockSpec((tm, dout), lambda i: (i, 0)),
        compiler_params=_mosaic_params(("parallel",), blk),
        cost_estimate=cost,
    )(x2d, w, bias.reshape(1, dout))


def matmul_residual(x2d, w, bias, residual2d):
    n, din = x2d.shape
    dout = w.shape[1]
    tm = _row_tile(n)
    blk = (_nb((tm, din), x2d.dtype) + _nb((din, dout), w.dtype)
           + _nb((1, dout), jnp.float32) + 2 * _nb((tm, dout), residual2d.dtype))
    cost = pl.CostEstimate(
        flops=int(2 * n * din * dout + n * dout), transcendentals=0,
        bytes_accessed=int(_nb((n, din), x2d.dtype) + _nb((din, dout), w.dtype)
                           + 2 * _nb((n, dout), residual2d.dtype)))
    return pl.pallas_call(
        matmul_residual_kernel,
        out_shape=jax.ShapeDtypeStruct((n, dout), residual2d.dtype),
        grid=(pl.cdiv(n, tm),),
        in_specs=[pl.BlockSpec((tm, din), lambda i: (i, 0)),
                  pl.BlockSpec((din, dout), lambda i: (0, 0)),
                  pl.BlockSpec((1, dout), lambda i: (0, 0)),
                  pl.BlockSpec((tm, dout), lambda i: (i, 0))],
        out_specs=pl.BlockSpec((tm, dout), lambda i: (i, 0)),
        compiler_params=_mosaic_params(("parallel",), blk),
        cost_estimate=cost,
    )(x2d, w, bias.reshape(1, dout), residual2d)


def ln_ffn_residual(x2d, a, b, w1, b1, w2, b2):
    n, h = x2d.shape
    dff = w1.shape[1]
    tm = _row_tile(n)
    blk = (2 * _nb((tm, h), x2d.dtype) + 2 * _nb((1, h), jnp.float32)
           + _nb((h, dff), w1.dtype) + _nb((1, dff), jnp.float32)
           + _nb((dff, h), w2.dtype) + _nb((1, h), jnp.float32))
    cost = pl.CostEstimate(
        flops=int(4 * n * h * dff + 8 * n * h),
        transcendentals=int(2 * n),
        bytes_accessed=int(2 * _nb((n, h), x2d.dtype) + _nb((h, dff), w1.dtype)
                           + _nb((dff, h), w2.dtype)))
    return pl.pallas_call(
        ln_ffn_residual_kernel,
        out_shape=jax.ShapeDtypeStruct((n, h), x2d.dtype),
        grid=(pl.cdiv(n, tm),),
        in_specs=[pl.BlockSpec((tm, h), lambda i: (i, 0)),
                  pl.BlockSpec((1, h), lambda i: (0, 0)),
                  pl.BlockSpec((1, h), lambda i: (0, 0)),
                  pl.BlockSpec((h, dff), lambda i: (0, 0)),
                  pl.BlockSpec((1, dff), lambda i: (0, 0)),
                  pl.BlockSpec((dff, h), lambda i: (0, 0)),
                  pl.BlockSpec((1, h), lambda i: (0, 0))],
        out_specs=pl.BlockSpec((tm, h), lambda i: (i, 0)),
        compiler_params=_mosaic_params(("parallel",), blk),
        cost_estimate=cost,
    )(x2d, a.reshape(1, h), b.reshape(1, h),
      w1, b1.reshape(1, dff), w2, b2.reshape(1, h))


def _qmap(col):
    return lambda i, qi: (i, qi, col)


def _kvmap(col):
    return lambda i, qi: (i, 0, col)


def sdpa_rowmajor(q_arr, q_col, kv_arr, k_col, v_col, bias, num_heads, h):
    """Row-major multi-head attention.

    q_arr : [B, Tq, nq*H]  (column block q_col holds Q)
    kv_arr: [B, Tk, nk*H]  (column blocks k_col / v_col hold K / V)
    bias  : [B, Tq, Tk] additive mask bias (bf16, 0 or -1e9)
    Output: [B, Tq, H] head-contiguous (same layout torch's reshape produces).
    No HBM transposes: Q/K/V are picked out of the fused projection outputs
    purely via column block indices, and all DMA blocks are H-wide (lane-dense).
    """
    assert h % 128 == 0, "lane-dense attention blocking expects H % 128 == 0"
    b, tq_total, _ = q_arr.shape
    tk = kv_arr.shape[1]
    tq = _row_tile(tq_total)
    kern = functools.partial(attn_kernel, num_heads=num_heads)
    blk = (_nb((1, tq, h), q_arr.dtype) + 2 * _nb((1, tk, h), kv_arr.dtype)
           + _nb((1, tq, tk), bias.dtype) + _nb((1, tq, h), q_arr.dtype))
    cost = pl.CostEstimate(
        flops=int(4 * b * tq_total * tk * h + 12 * b * num_heads * tq_total * tk),
        transcendentals=int(b * num_heads * tq_total * tk + b * num_heads * tq_total),
        bytes_accessed=int(2 * _nb((b, tq_total, h), q_arr.dtype)
                           + 2 * _nb((b, tk, h), kv_arr.dtype)
                           + _nb((b, tq_total, tk), bias.dtype)))
    return pl.pallas_call(
        kern,
        out_shape=jax.ShapeDtypeStruct((b, tq_total, h), q_arr.dtype),
        grid=(b, pl.cdiv(tq_total, tq)),
        in_specs=[pl.BlockSpec((1, tq, h), _qmap(q_col)),
                  pl.BlockSpec((1, tk, h), _kvmap(k_col)),
                  pl.BlockSpec((1, tk, h), _kvmap(v_col)),
                  pl.BlockSpec((1, tq, tk), lambda i, qi: (i, qi, 0))],
        out_specs=pl.BlockSpec((1, tq, h), lambda i, qi: (i, qi, 0)),
        compiler_params=_mosaic_params(("parallel", "parallel"), blk),
        cost_estimate=cost,
    )(q_arr, kv_arr, kv_arr, bias)


def mask_to_bias(mask):
    """Multiplicative {0,1} mask -> additive bf16 bias (0 / -1e9), computed once."""
    return jnp.where(mask > 0, 0.0, -1e9).astype(jnp.bfloat16)


# ----------------------------------------------------------------------------
# Decoder-layer forward
# ----------------------------------------------------------------------------
def _self_attention_sublayer(x, trg_bias, p, ln_a, ln_b, num_heads):
    b, t, h = x.shape
    x2d = x.reshape(b * t, h)
    # Fused LN + QKV projection (single [H, 3H] bf16 matmul); stays row-major.
    qkv = ln_matmul(x2d, ln_a, ln_b, p["wqkv"], p["bqkv"])        # [B*T, 3H]
    qkv3d = qkv.reshape(b, t, 3 * h)                              # free reshape
    o = sdpa_rowmajor(qkv3d, 0, qkv3d, 1, 2, trg_bias, num_heads, h)  # [B, T, H]
    # Output projection with fused residual (dropout = identity in eval).
    return matmul_residual(o.reshape(b * t, h), p["wo"], p["bo"], x2d).reshape(b, t, h)


def _cross_attention_sublayer(x, memory, src_bias, p, ln_a, ln_b, num_heads):
    b, t, h = x.shape
    s = memory.shape[1]
    x2d = x.reshape(b * t, h)
    m2d = memory.reshape(b * s, h)
    q3d = ln_matmul(x2d, ln_a, ln_b, p["wq"], p["bq"]).reshape(b, t, h)
    kv3d = matmul(m2d, p["wkv"], p["bkv"]).reshape(b, s, 2 * h)   # [B, S, 2H]
    o = sdpa_rowmajor(q3d, 0, kv3d, 0, 1, src_bias, num_heads, h)
    return matmul_residual(o.reshape(b * t, h), p["wo"], p["bo"], x2d).reshape(b, t, h)


def decoder_layer(x, memory, src_mask, trg_mask, params, num_heads):
    b, t, h = x.shape
    trg_bias = mask_to_bias(trg_mask)
    src_bias = mask_to_bias(src_mask)
    # sublayer 0: self-attention
    x = _self_attention_sublayer(x, trg_bias, params["self_attn"],
                                 params["ln0_a"], params["ln0_b"], num_heads)
    # sublayer 1: source (cross) attention
    x = _cross_attention_sublayer(x, memory, src_bias, params["src_attn"],
                                  params["ln1_a"], params["ln1_b"], num_heads)
    # sublayer 2: feed-forward (LN + W1 + ReLU + W2 + residual fused)
    out = ln_ffn_residual(x.reshape(b * t, h), params["ln2_a"], params["ln2_b"],
                          params["ff_w1"], params["ff_b1"],
                          params["ff_w2"], params["ff_b2"])
    return out.reshape(b, t, h)


# ----------------------------------------------------------------------------
# Deterministic parameter construction and smoke test
# ----------------------------------------------------------------------------
def init_params(key, hidden, d_ff):
    def w(k, shape, scale=0.05):
        return scale * jax.random.normal(k, shape, dtype=jnp.float32)

    keys = jax.random.split(key, 16)
    attn_self = {"wq": w(keys[0], (hidden, hidden)), "bq": jnp.zeros((hidden,), jnp.float32),
                 "wk": w(keys[1], (hidden, hidden)), "bk": jnp.zeros((hidden,), jnp.float32),
                 "wv": w(keys[2], (hidden, hidden)), "bv": jnp.zeros((hidden,), jnp.float32),
                 "wo": w(keys[3], (hidden, hidden)), "bo": jnp.zeros((hidden,), jnp.float32)}
    attn_src = {"wq": w(keys[4], (hidden, hidden)), "bq": jnp.zeros((hidden,), jnp.float32),
                "wk": w(keys[5], (hidden, hidden)), "bk": jnp.zeros((hidden,), jnp.float32),
                "wv": w(keys[6], (hidden, hidden)), "bv": jnp.zeros((hidden,), jnp.float32),
                "wo": w(keys[7], (hidden, hidden)), "bo": jnp.zeros((hidden,), jnp.float32)}
    return {
        "self_attn": attn_self,
        "src_attn": attn_src,
        "ff_w1": w(keys[8], (hidden, d_ff)), "ff_b1": jnp.zeros((d_ff,), jnp.float32),
        "ff_w2": w(keys[9], (d_ff, hidden)), "ff_b2": jnp.zeros((hidden,), jnp.float32),
        "ln0_a": jnp.ones((hidden,), jnp.float32), "ln0_b": jnp.zeros((hidden,), jnp.float32),
        "ln1_a": jnp.ones((hidden,), jnp.float32), "ln1_b": jnp.zeros((hidden,), jnp.float32),
        "ln2_a": jnp.ones((hidden,), jnp.float32), "ln2_b": jnp.zeros((hidden,), jnp.float32),
    }


def fuse_decoder_params(p, num_heads):
    """One-time weight prep: QKV / KV concat, fold 1/sqrt(dk) into Q, cast the
    MXU weight panels to bf16 (biases / LN params stay f32; f32 accumulation
    in-kernel bounds the error)."""
    hidden = p["self_attn"]["wq"].shape[0]
    scale = 1.0 / math.sqrt(hidden // num_heads)
    fused = dict(p)
    sa = p["self_attn"]
    fused["self_attn"] = {
        "wqkv": jnp.concatenate([sa["wq"] * scale, sa["wk"], sa["wv"]],
                                axis=1).astype(jnp.bfloat16),
        "bqkv": jnp.concatenate([sa["bq"] * scale, sa["bk"], sa["bv"]], axis=0),
        "wo": sa["wo"].astype(jnp.bfloat16), "bo": sa["bo"],
    }
    ca = p["src_attn"]
    fused["src_attn"] = {
        "wq": (ca["wq"] * scale).astype(jnp.bfloat16), "bq": ca["bq"] * scale,
        "wkv": jnp.concatenate([ca["wk"], ca["wv"]], axis=1).astype(jnp.bfloat16),
        "bkv": jnp.concatenate([ca["bk"], ca["bv"]], axis=0),
        "wo": ca["wo"].astype(jnp.bfloat16), "bo": ca["bo"],
    }
    fused["ff_w1"] = p["ff_w1"].astype(jnp.bfloat16)
    fused["ff_w2"] = p["ff_w2"].astype(jnp.bfloat16)
    return fused


if __name__ == "__main__":
    # Small shapes; H is a multiple of 128 so all attention blocks are lane-dense.
    B, T, S, H, NH, DFF = 2, 16, 16, 128, 4, 256

    root = jax.random.PRNGKey(0)
    k_x, k_m, k_p = jax.random.split(root, 3)

    x = jax.random.normal(k_x, (B, T, H), dtype=jnp.float32)        # decoder input
    memory = jax.random.normal(k_m, (B, S, H), dtype=jnp.float32)   # encoder memory
    # causal target mask [B, T, T]; full source mask [B, T, S]  (1 = attend)
    trg_mask = jnp.broadcast_to(jnp.tril(jnp.ones((T, T), jnp.float32)), (B, T, T))
    src_mask = jnp.ones((B, T, S), jnp.float32)

    params = fuse_decoder_params(init_params(k_p, H, DFF), NH)

    out = decoder_layer(x, memory, src_mask, trg_mask, params, NH)
    out = jax.block_until_ready(out)
    assert out.shape == (B, T, H)
    print("KERNEL_OK")
</pallas_src>

<mosaic_0001>
module attributes {stable_mosaic.version = 11 : i64} {
  func.func @ln_matmul_kernel(%arg0: i32, %arg1: memref<32x128xf32, #tpu.memory_space<vmem>>, %arg2: memref<1x128xf32, #tpu.memory_space<vmem>>, %arg3: memref<1x128xf32, #tpu.memory_space<vmem>>, %arg4: memref<128x384xbf16, #tpu.memory_space<vmem>>, %arg5: memref<1x384xf32, #tpu.memory_space<vmem>>, %arg6: memref<32x384xf32, #tpu.memory_space<vmem>>) attributes {dimension_semantics = [#tpu.dimension_semantics<parallel>], iteration_bounds = array<i64: 1>, scalar_prefetch = 0 : i64, scratch_operands = 0 : i64, tpu.core_type = #tpu.core_type<tc>, window_params = [{transform_indices = @transform_0, window_bounds = array<i64: 32, 128>}, {pipeline_mode = #tpu.pipeline_mode<synchronous>, transform_indices = @transform_1, window_bounds = array<i64: 1, 128>}, {pipeline_mode = #tpu.pipeline_mode<synchronous>, transform_indices = @transform_2, window_bounds = array<i64: 1, 128>}, {pipeline_mode = #tpu.pipeline_mode<synchronous>, transform_indices = @transform_3, window_bounds = array<i64: 128, 384>}, {pipeline_mode = #tpu.pipeline_mode<synchronous>, transform_indices = @transform_4, window_bounds = array<i64: 1, 384>}, {transform_indices = @transform_5, window_bounds = array<i64: 32, 384>}]} {
    %c0 = arith.constant 0 : index
    %c0_0 = arith.constant 0 : index
    %0 = vector.load %arg1[%c0, %c0_0] : memref<32x128xf32, #tpu.memory_space<vmem>>, vector<32x128xf32>
    %c0_1 = arith.constant 0 : index
    %c0_2 = arith.constant 0 : index
    %1 = vector.load %arg2[%c0_1, %c0_2] : memref<1x128xf32, #tpu.memory_space<vmem>>, vector<1x128xf32>
    %c0_3 = arith.constant 0 : index
    %c0_4 = arith.constant 0 : index
    %2 = vector.load %arg3[%c0_3, %c0_4] : memref<1x128xf32, #tpu.memory_space<vmem>>, vector<1x128xf32>
    %cst = arith.constant dense<0.000000e+00> : vector<32xf32>
    %3 = vector.multi_reduction <add>, %0, %cst [1] : vector<32x128xf32> to vector<32xf32>
    %4 = vector.shape_cast %3 : vector<32xf32> to vector<32x1xf32>
    %cst_5 = arith.constant 1.280000e+02 : f32
    %5 = vector.broadcast %cst_5 : f32 to vector<32x1xf32>
    %6 = arith.divf %4, %5 : vector<32x1xf32>
    %7 = vector.broadcast %6 : vector<32x1xf32> to vector<32x128xf32>
    %8 = arith.subf %0, %7 : vector<32x128xf32>
    %9 = arith.mulf %8, %8 : vector<32x128xf32>
    %cst_6 = arith.constant dense<0.000000e+00> : vector<32xf32>
    %10 = vector.multi_reduction <add>, %9, %cst_6 [1] : vector<32x128xf32> to vector<32xf32>
    %11 = vector.shape_cast %10 : vector<32xf32> to vector<32x1xf32>
    %cst_7 = arith.constant 0.00787401571 : f32
    %12 = vector.broadcast %cst_7 : f32 to vector<32x1xf32>
    %13 = arith.mulf %11, %12 : vector<32x1xf32>
    %14 = math.sqrt %13 : vector<32x1xf32>
    %cst_8 = arith.constant 9.99999997E-7 : f32
    %15 = vector.broadcast %cst_8 : f32 to vector<32x1xf32>
    %16 = arith.addf %14, %15 : vector<32x1xf32>
    %17 = tpu.reciprocal %16 : vector<32x1xf32> -> vector<32x1xf32>
    %18 = vector.broadcast %1 : vector<1x128xf32> to vector<32x128xf32>
    %19 = arith.mulf %18, %8 : vector<32x128xf32>
    %20 = vector.broadcast %17 : vector<32x1xf32> to vector<32x128xf32>
    %21 = arith.mulf %19, %20 : vector<32x128xf32>
    %22 = vector.broadcast %2 : vector<1x128xf32> to vector<32x128xf32>
    %23 = arith.addf %21, %22 : vector<32x128xf32>
    %24 = arith.truncf %23 : vector<32x128xf32> to vector<32x128xbf16>
    %c0_9 = arith.constant 0 : index
    %c0_10 = arith.constant 0 : index
    %25 = vector.load %arg4[%c0_9, %c0_10] : memref<128x384xbf16, #tpu.memory_space<vmem>>, vector<128x384xbf16>
    %cst_11 = arith.constant dense<0.000000e+00> : vector<32x384xf32>
    %26 = tpu.matmul %24, %25, %cst_11 {dimension_numbers = #tpu.dot_dimension_numbers<[1], [0], [0], [1], [0, 0, 1, 1], [], []>} : vector<32x128xbf16>, vector<128x384xbf16>, vector<32x384xf32> -> vector<32x384xf32>
    %c0_12 = arith.constant 0 : index
    %c0_13 = arith.constant 0 : index
    %27 = vector.load %arg5[%c0_12, %c0_13] : memref<1x384xf32, #tpu.memory_space<vmem>>, vector<1x384xf32>
    %28 = vector.broadcast %27 : vector<1x384xf32> to vector<32x384xf32>
    %29 = arith.addf %26, %28 : vector<32x384xf32>
    %c0_14 = arith.constant 0 : index
    %c0_15 = arith.constant 0 : index
    %30 = vector.load %arg6[%c0_14, %c0_15] : memref<32x384xf32, #tpu.memory_space<vmem>>, vector<32x384xf32>
    tpu.vector_store %arg6[%c0_14, %c0_15], %29 {strides = array<i32>} : memref<32x384xf32, #tpu.memory_space<vmem>>, vector<32x384xf32>,
    return
  }
  func.func @transform_0(%arg0: i32) -> (i32, i32) {
    %c0_i32 = arith.constant 0 : i32
    %c0_i32_0 = arith.constant 0 : i32
    return %arg0, %c0_i32 : i32, i32
  }
  func.func @transform_1(%arg0: i32) -> (i32, i32) {
    %c0_i32 = arith.constant 0 : i32
    %c0_i32_0 = arith.constant 0 : i32
    %c0_i32_1 = arith.constant 0 : i32
    return %c0_i32, %c0_i32_0 : i32, i32
  }
  func.func @transform_2(%arg0: i32) -> (i32, i32) {
    %c0_i32 = arith.constant 0 : i32
    %c0_i32_0 = arith.constant 0 : i32
    %c0_i32_1 = arith.constant 0 : i32
    return %c0_i32, %c0_i32_0 : i32, i32
  }
  func.func @transform_3(%arg0: i32) -> (i32, i32) {
    %c0_i32 = arith.constant 0 : i32
    %c0_i32_0 = arith.constant 0 : i32
    %c0_i32_1 = arith.constant 0 : i32
    return %c0_i32, %c0_i32_0 : i32, i32
  }
  func.func @transform_4(%arg0: i32) -> (i32, i32) {
    %c0_i32 = arith.constant 0 : i32
    %c0_i32_0 = arith.constant 0 : i32
    %c0_i32_1 = arith.constant 0 : i32
    return %c0_i32, %c0_i32_0 : i32, i32
  }
  func.func @transform_5(%arg0: i32) -> (i32, i32) {
    %c0_i32 = arith.constant 0 : i32
    %c0_i32_0 = arith.constant 0 : i32
    return %arg0, %c0_i32 : i32, i32
  }
}

</mosaic_0001>

<llo_original>
// kernel: tpu_custom_call.1
$region0: #{tpu_custom_call.1}
  #allocation0 [shape = 'u32[]', space=smem, size = 0x4, offset = 0x4, fixed_abs, tag = 'smem constant byte address 0x4 - core index']
  #allocation1 [shape = 'u32[144,128]{1,0:T(1,128)}', space=vmem, size = 0x12000, scoped, tag = 'internal scratch']
  %s0 = inlined_call_operand.hbm [shape: f32[32,128], index: 0, kind: input, shape index: {}]
  %s1 = inlined_call_operand.vmem [shape: f32[1,128], index: 1, kind: input, shape index: {}]
  %s2 = inlined_call_operand.vmem [shape: f32[1,128], index: 2, kind: input, shape index: {}]
  %s3 = inlined_call_operand.hbm [shape: bf16[128,384], index: 3, kind: input, shape index: {}]
  %s4 = inlined_call_operand.vmem [shape: f32[1,384], index: 4, kind: input, shape index: {}]
  %s5 = inlined_call_operand.hbm [shape: f32[32,384], index: 5, kind: output, shape index: {}]
  %s6 = sld [smem:[#allocation0]]
  $region38: #{tpu_custom_call.1} parent=0
    _
  %s8 = ssub.s32 1, %s6
  %s9 = scalar_select 0, %s8, %s6
  $region1: #{tpu_custom_call.1} parent=0
    #allocation2 [shape = 'u8[16384]{0}', space=vmem, size = 0x4000, scoped, tag = 'input window, operand 0, single buffered']
    #allocation3 [shape = 's32[1]{0}', space=sflag, size = 0x4, scoped, tag = 'scoped memory for tpu_custom_call.1']
    #allocation4 [shape = 's32[1]{0}', space=sflag, size = 0x4, scoped, tag = 'scoped memory for tpu_custom_call.1']
    #allocation5 [shape = 'u8[98304]{0}', space=vmem, size = 0x18000, scoped, tag = 'input window, operand 3, single buffered']
    #allocation6 [shape = 's32[1]{0}', space=sflag, size = 0x4, scoped, tag = 'scoped memory for tpu_custom_call.1']
    #allocation7 [shape = 'u8[49152]{0}', space=vmem, size = 0xc000, scoped, tag = 'output window, operand 0, single buffered']
    %10 = vsyncpa [#allocation3], 0
    %11 = vsyncpa [#allocation6], 0
    %12 = vsyncpa [#allocation4], 0
    // Predicated region
    $region2: #{tpu_custom_call.1} parent=1 // pred_check
      _
    $region3: #{tpu_custom_call.1} parent=1 // pred_check_branch
      %14 = sbr.rel (0) target = $region5
    $region4: #{tpu_custom_call.1} parent=1 // pred_region
      %s16 = ssub.s32 512, 512
      %17 = vsyncadd [#allocation3], %s16
      %s18 = sshll.u32 [#allocation2], 4
      %s19 = int_to_ptr.vmem [resolvable:$true] %s18
      %24 = dma.hbm_to_vmem [thread:$0]  %s0, 512, %s19, [#allocation3], 128, 128, 8
    $region5: #{tpu_custom_call.1} parent=1 // pred_fallthru
      _
    // Predicated region
    $region6: #{tpu_custom_call.1} parent=1 // pred_check
      _
    $region7: #{tpu_custom_call.1} parent=1 // pred_check_branch
      %26 = sbr.rel (0) target = $region9
    $region8: #{tpu_custom_call.1} parent=1 // pred_region
      _
    $region9: #{tpu_custom_call.1} parent=1 // pred_fallthru
      _
    // Predicated region
    $region10: #{tpu_custom_call.1} parent=1 // pred_check
      _
    $region11: #{tpu_custom_call.1} parent=1 // pred_check_branch
      %28 = sbr.rel (0) target = $region13
    $region12: #{tpu_custom_call.1} parent=1 // pred_region
      _
    $region13: #{tpu_custom_call.1} parent=1 // pred_fallthru
      _
    // Predicated region
    $region14: #{tpu_custom_call.1} parent=1 // pred_check
      _
    $region15: #{tpu_custom_call.1} parent=1 // pred_check_branch
      %30 = sbr.rel (0) target = $region17
    $region16: #{tpu_custom_call.1} parent=1 // pred_region
      %s32 = ssub.s32 3072, 3072
      %33 = vsyncadd [#allocation6], %s32
      %s34 = sshll.u32 [#allocation5], 4
      %s35 = int_to_ptr.vmem [resolvable:$true] %s34
      %40 = dma.hbm_to_vmem [thread:$0]  %s3, 3072, %s35, [#allocation6], 192, 192, 12
    $region17: #{tpu_custom_call.1} parent=1 // pred_fallthru
      _
    // Predicated region
    $region18: #{tpu_custom_call.1} parent=1 // pred_check
      _
    $region19: #{tpu_custom_call.1} parent=1 // pred_check_branch
      %42 = sbr.rel (0) target = $region21
    $region20: #{tpu_custom_call.1} parent=1 // pred_region
      _
    $region21: #{tpu_custom_call.1} parent=1 // pred_fallthru
      _
    // Predicated region
    $region22: #{tpu_custom_call.1} parent=1 // pred_check
      _
    $region23: #{tpu_custom_call.1} parent=1 // pred_check_branch
      %44 = sbr.rel (0) target = $region25
    $region24: #{tpu_custom_call.1} parent=1 // pred_region
      %45 = dma.done [#allocation3], 512
    $region25: #{tpu_custom_call.1} parent=1 // pred_fallthru
      _
    // Predicated region
    $region26: #{tpu_custom_call.1} parent=1 // pred_check
      _
    $region27: #{tpu_custom_call.1} parent=1 // pred_check_branch
      %47 = sbr.rel (0) target = $region29
    $region28: #{tpu_custom_call.1} parent=1 // pred_region
      %48 = dma.done [#allocation6], 3072
    $region29: #{tpu_custom_call.1} parent=1 // pred_fallthru
      _
    %v50 = vld [vmem:[#allocation2] sm:$0xff]
    %v51 = vld [vmem:[#allocation2 + $0x8] sm:$0xff]
    %v52 = vld [vmem:[#allocation2 + $0x10] sm:$0xff]
    %v53 = vld [vmem:[#allocation2 + $0x18] sm:$0xff]
    %v54 = vld [vmem:[%s1] sm:$0x1]
    %v55 = vld [vmem:[%s2] sm:$0x1]
    %56 = vadd.xlane.f32.xlu0 %v50
    %v57 = vpop.xlane.xlu0 %56
    %58 = vadd.xlane.f32.xlu0 %v51
    %v59 = vpop.xlane.xlu0 %58
    %60 = vadd.xlane.f32.xlu0 %v52
    %v61 = vpop.xlane.xlu0 %60
    %62 = vadd.xlane.f32.xlu0 %v53
    %v63 = vpop.xlane.xlu0 %62
    %v64 = vrcp.pop 128.0
    %v65 = vmul.f32 %v57, %v64
    %v66 = vmul.f32 %v59, %v64
    %v67 = vmul.f32 %v61, %v64
    %v68 = vmul.f32 %v63, %v64
    %v69 = vsub.f32 %v50, %v65
    %v70 = vsub.f32 %v51, %v66
    %v71 = vsub.f32 %v52, %v67
    %v72 = vsub.f32 %v53, %v68
    %v73 = vmul.f32 %v69, %v69
    %v74 = vmul.f32 %v70, %v70
    %v75 = vmul.f32 %v71, %v71
    %v76 = vmul.f32 %v72, %v72
    %77 = vadd.xlane.f32.xlu0 %v73
    %v78 = vpop.xlane.xlu0 %77
    %79 = vadd.xlane.f32.xlu0 %v74
    %v80 = vpop.xlane.xlu0 %79
    %81 = vadd.xlane.f32.xlu0 %v75
    %v82 = vpop.xlane.xlu0 %81
    %83 = vadd.xlane.f32.xlu0 %v76
    %v84 = vpop.xlane.xlu0 %83
    %v85 = vmul.f32 %v78, 0.007874016
    %v86 = vmul.f32 %v80, 0.007874016
    %v87 = vmul.f32 %v82, 0.007874016
    %v88 = vmul.f32 %v84, 0.007874016
    %v89 = vrsqrt.pop %v85
    %v90 = vmul.f32 %v85, %v89
    %vm91 = vcmp.eq.f32.partialorder %v85, inf
    %v92 = vsel %vm91, %v85, %v90
    %vm93 = vcmp.eq.f32.partialorder %v85, 0.0
    %v94 = vand.u32 %v85, 2147483648
    %v95 = vsel %vm93, %v94, %v92
    %v96 = vrsqrt.pop %v86
    %v97 = vmul.f32 %v86, %v96
    %vm98 = vcmp.eq.f32.partialorder %v86, inf
    %v99 = vsel %vm98, %v86, %v97
    %vm100 = vcmp.eq.f32.partialorder %v86, 0.0
    %v101 = vand.u32 %v86, 2147483648
    %v102 = vsel %vm100, %v101, %v99
    %v103 = vrsqrt.pop %v87
    %v104 = vmul.f32 %v87, %v103
    %vm105 = vcmp.eq.f32.partialorder %v87, inf
    %v106 = vsel %vm105, %v87, %v104
    %vm107 = vcmp.eq.f32.partialorder %v87, 0.0
    %v108 = vand.u32 %v87, 2147483648
    %v109 = vsel %vm107, %v108, %v106
    %v110 = vrsqrt.pop %v88
    %v111 = vmul.f32 %v88, %v110
    %vm112 = vcmp.eq.f32.partialorder %v88, inf
    %v113 = vsel %vm112, %v88, %v111
    %vm114 = vcmp.eq.f32.partialorder %v88, 0.0
    %v115 = vand.u32 %v88, 2147483648
    %v116 = vsel %vm114, %v115, %v113
    %v117 = vadd.f32 %v95, 1e-06
    %v118 = vadd.f32 %v102, 1e-06
    %v119 = vadd.f32 %v109, 1e-06
    %v120 = vadd.f32 %v116, 1e-06
    %v121 = vrcp.pop %v117
    %v122 = vrcp.pop %v118
    %v123 = vrcp.pop %v119
    %v124 = vrcp.pop %v120
    %v126 = vlaneseq
    %v127 = vshrl.u32 %v126, 7
    %v128 = vsub.s32 0, %v127
    %v129 = vrot.slane %v54, %v128
    %v131 = vmul.f32 %v129, %v69
    %v132 = vmul.f32 %v129, %v70
    %v133 = vmul.f32 %v129, %v71
    %v134 = vmul.f32 %v129, %v72
    %v135 = vmul.f32 %v131, %v121
    %v136 = vmul.f32 %v132, %v122
    %v137 = vmul.f32 %v133, %v123
    %v138 = vmul.f32 %v134, %v124
    %v140 = vlaneseq
    %v141 = vshrl.u32 %v140, 7
    %v142 = vsub.s32 0, %v141
    %v143 = vrot.slane %v55, %v142
    %v145 = vadd.f32 %v135, %v143
    %v146 = vadd.f32 %v136, %v143
    %v147 = vadd.f32 %v137, %v143
    %v148 = vadd.f32 %v138, %v143
    %v149 = vpack.c.bf16 %v146, %v145
    %v150 = vpack.c.bf16 %v148, %v147
    %v151 = vld [vmem:[#allocation5] sm:$0xff]
    %v152 = vld [vmem:[#allocation5 + $0x8] sm:$0xf]
    %v153 = vld [vmem:[#allocation5 + $0xc] sm:$0xff]
    %v154 = vld [vmem:[#allocation5 + $0x14] sm:$0xf]
    %v155 = vld [vmem:[#allocation5 + $0x18] sm:$0xff]
    %v156 = vld [vmem:[#allocation5 + $0x20] sm:$0xf]
    %v157 = vld [vmem:[#allocation5 + $0x24] sm:$0xff]
    %v158 = vld [vmem:[#allocation5 + $0x2c] sm:$0xf]
    %v159 = vld [vmem:[#allocation5 + $0x30] sm:$0xff]
    %v160 = vld [vmem:[#allocation5 + $0x38] sm:$0xf]
    %v161 = vld [vmem:[#allocation5 + $0x3c] sm:$0xff]
    %v162 = vld [vmem:[#allocation5 + $0x44] sm:$0xf]
    %v163 = vld [vmem:[#allocation5 + $0x48] sm:$0xff]
    %v164 = vld [vmem:[#allocation5 + $0x50] sm:$0xf]
    %v165 = vld [vmem:[#allocation5 + $0x54] sm:$0xff]
    %v166 = vld [vmem:[#allocation5 + $0x5c] sm:$0xf]
    %v167 = vld [vmem:[#allocation5 + $0x60] sm:$0xff]
    %v168 = vld [vmem:[#allocation5 + $0x68] sm:$0xf]
    %v169 = vld [vmem:[#allocation5 + $0x6c] sm:$0xff]
    %v170 = vld [vmem:[#allocation5 + $0x74] sm:$0xf]
    %v171 = vld [vmem:[#allocation5 + $0x78] sm:$0xff]
    %v172 = vld [vmem:[#allocation5 + $0x80] sm:$0xf]
    %v173 = vld [vmem:[#allocation5 + $0x84] sm:$0xff]
    %v174 = vld [vmem:[#allocation5 + $0x8c] sm:$0xf]
    %v175 = vld [vmem:[#allocation5 + $0x90] sm:$0xff]
    %v176 = vld [vmem:[#allocation5 + $0x98] sm:$0xf]
    %v177 = vld [vmem:[#allocation5 + $0x9c] sm:$0xff]
    %v178 = vld [vmem:[#allocation5 + $0xa4] sm:$0xf]
    %v179 = vld [vmem:[#allocation5 + $0xa8] sm:$0xff]
    %v180 = vld [vmem:[#allocation5 + $0xb0] sm:$0xf]
    %v181 = vld [vmem:[#allocation5 + $0xb4] sm:$0xff]
    %v182 = vld [vmem:[#allocation5 + $0xbc] sm:$0xf]
    %v183 = vld [vmem:[%s4] sm:$0x7]
    %v185 = vlaneseq
    %v186 = vshrl.u32 %v185, 7
    %v187 = vsub.s32 0, %v186
    %v188 = vrot.slane %v183, %v187
    %v189 = vlaneseq
    %v190 = vshrl.u32 %v189, 7
    %v191 = vsub.s32 1, %v190
    %v192 = vrot.slane %v183, %v191
    %v193 = vlaneseq
    %v194 = vshrl.u32 %v193, 7
    %v195 = vsub.s32 2, %v194
    %v196 = vrot.slane %v183, %v195
    %v232 = vunpack.c.l.b16 %v151
    %v233 = vunpack.c.h.b16 %v151
    %v234 = vunpack.c.l.b16 %v152
    %v235 = vunpack.c.l.b16 %v153
    %v236 = vunpack.c.h.b16 %v153
    %v237 = vunpack.c.l.b16 %v154
    %v238 = vunpack.c.l.b16 %v155
    %v239 = vunpack.c.h.b16 %v155
    %v240 = vunpack.c.l.b16 %v156
    %v241 = vunpack.c.l.b16 %v157
    %v242 = vunpack.c.h.b16 %v157
    %v243 = vunpack.c.l.b16 %v158
    %v244 = vunpack.c.l.b16 %v159
    %v245 = vunpack.c.h.b16 %v159
    %v246 = vunpack.c.l.b16 %v160
    %v247 = vunpack.c.l.b16 %v161
    %v248 = vunpack.c.h.b16 %v161
    %v249 = vunpack.c.l.b16 %v162
    %v250 = vunpack.c.l.b16 %v163
    %v251 = vunpack.c.h.b16 %v163
    %v252 = vunpack.c.l.b16 %v164
    %v253 = vunpack.c.l.b16 %v165
    %v254 = vunpack.c.h.b16 %v165
    %v255 = vunpack.c.l.b16 %v166
    %v256 = vunpack.c.l.b16 %v167
    %v257 = vunpack.c.h.b16 %v167
    %v258 = vunpack.c.l.b16 %v168
    %v259 = vunpack.c.l.b16 %v169
    %v260 = vunpack.c.h.b16 %v169
    %v261 = vunpack.c.l.b16 %v170
    %v262 = vunpack.c.l.b16 %v171
    %v263 = vunpack.c.h.b16 %v171
    %v264 = vunpack.c.l.b16 %v172
    %v265 = vunpack.c.l.b16 %v173
    %v266 = vunpack.c.h.b16 %v173
    %v267 = vunpack.c.l.b16 %v174
    %v268 = vunpack.c.l.b16 %v175
    %v269 = vunpack.c.h.b16 %v175
    %v270 = vunpack.c.l.b16 %v176
    %v271 = vunpack.c.l.b16 %v177
    %v272 = vunpack.c.h.b16 %v177
    %v273 = vunpack.c.l.b16 %v178
    %v274 = vunpack.c.l.b16 %v179
    %v275 = vunpack.c.h.b16 %v179
    %v276 = vunpack.c.l.b16 %v180
    %v277 = vunpack.c.l.b16 %v181
    %v278 = vunpack.c.h.b16 %v181
    %v279 = vunpack.c.l.b16 %v182
    %v280 = vpack.c.b16 %v235, %v232
    %v281 = vpack.c.b16 %v236, %v233
    %v282 = vpack.c.b16 %v237, %v234
    %v283 = vpack.c.b16 %v241, %v238
    %v284 = vpack.c.b16 %v242, %v239
    %v285 = vpack.c.b16 %v243, %v240
    %v286 = vpack.c.b16 %v247, %v244
    %v287 = vpack.c.b16 %v248, %v245
    %v288 = vpack.c.b16 %v249, %v246
    %v289 = vpack.c.b16 %v253, %v250
    %v290 = vpack.c.b16 %v254, %v251
    %v291 = vpack.c.b16 %v255, %v252
    %v292 = vpack.c.b16 %v259, %v256
    %v293 = vpack.c.b16 %v260, %v257
    %v294 = vpack.c.b16 %v261, %v258
    %v295 = vpack.c.b16 %v265, %v262
    %v296 = vpack.c.b16 %v266, %v263
    %v297 = vpack.c.b16 %v267, %v264
    %v298 = vpack.c.b16 %v271, %v268
    %v299 = vpack.c.b16 %v272, %v269
    %v300 = vpack.c.b16 %v273, %v270
    %v301 = vpack.c.b16 %v277, %v274
    %v302 = vpack.c.b16 %v278, %v275
    %v303 = vpack.c.b16 %v279, %v276
    %328 = vmatprep.subr.bf16.mxu0 %v281
    %329 = vmatpush1.bf16.msra.mxu0 %v280
    %330 = vmatprep.subr.bf16.mxu0 %v284
    %331 = vmatpush1.bf16.msra.mxu0 %v283
    %332 = vmatprep.subr.bf16.mxu0 %v287
    %333 = vmatpush1.bf16.msra.mxu0 %v286
    %334 = vmatprep.subr.bf16.mxu0 %v290
    %335 = vmatpush1.bf16.msra.mxu0 %v289
    %336 = vmatprep.subr.bf16.mxu0 %v293
    %337 = vmatpush1.bf16.msra.mxu0 %v292
    %338 = vmatprep.subr.bf16.mxu0 %v296
    %339 = vmatpush1.bf16.msra.mxu0 %v295
    %340 = vmatprep.subr.bf16.mxu0 %v299
    %341 = vmatpush1.bf16.msra.mxu0 %v298
    %342 = vmatprep.subr.bf16.mxu0 %v302
    %343 = vmatpush1.bf16.msra.mxu0 %v301
    %344 = vmatprep.subr.bf16.mxu0 0
    %345 = vmatpush1.bf16.msra.mxu0 0
    %346 = vmatprep.subr.bf16.mxu0 0
    %347 = vmatpush1.bf16.msra.mxu0 0
    %348 = vmatprep.subr.bf16.mxu0 0
    %349 = vmatpush1.bf16.msra.mxu0 0
    %350 = vmatprep.subr.bf16.mxu0 0
    %351 = vmatpush1.bf16.msra.mxu0 0
    %352 = vmatprep.subr.bf16.mxu0 0
    %353 = vmatpush1.bf16.msra.mxu0 0
    %354 = vmatprep.subr.bf16.mxu0 0
    %355 = vmatpush1.bf16.msra.mxu0 0
    %356 = vmatprep.subr.bf16.mxu0 0
    %357 = vmatpush1.bf16.msra.mxu0 0
    %358 = vmatprep.subr.bf16.mxu0 0
    %359 = vmatpush1.bf16.msra.mxu0 0
    %360 = vmatprep.mubr.bf16.mxu0 0
    %361 = vmatmul.mubr.bf16.gmra.mrb[0].mxu0 %v149
    %v362 = vpop.f32.mrb[0].mxu0
    %v363 = vadd.f32 %v188, %v362
    %v364 = vpop.f32.mrb[0].mxu0
    %v365 = vadd.f32 %v192, %v364
    %v366 = vpop.f32.mrb[0].mxu0
    %v367 = vadd.f32 %v188, %v366
    %v368 = vpop.f32.mrb[0].mxu0
    %v369 = vadd.f32 %v192, %v368
    %370 = vmatprep.mubr.bf16.mxu0 0
    %371 = vmatmul.mubr.bf16.gmra.mrb[0].mxu0 %v150
    %v372 = vpop.f32.mrb[0].mxu0
    %v373 = vadd.f32 %v188, %v372
    %v374 = vpop.f32.mrb[0].mxu0
    %v375 = vadd.f32 %v192, %v374
    %v376 = vpop.f32.mrb[0].mxu0
    %v377 = vadd.f32 %v188, %v376
    %v378 = vpop.f32.mrb[0].mxu0
    %v379 = vadd.f32 %v192, %v378
    %380 = vdwg.mxu0
    %381 = vmatprep.subr.bf16.mxu0 0
    %382 = vmatpush1.bf16.msra.mxu0 %v282
    %383 = vmatprep.subr.bf16.mxu0 0
    %384 = vmatpush1.bf16.msra.mxu0 %v285
    %385 = vmatprep.subr.bf16.mxu0 0
    %386 = vmatpush1.bf16.msra.mxu0 %v288
    %387 = vmatprep.subr.bf16.mxu0 0
    %388 = vmatpush1.bf16.msra.mxu0 %v291
    %389 = vmatprep.subr.bf16.mxu0 0
    %390 = vmatpush1.bf16.msra.mxu0 %v294
    %391 = vmatprep.subr.bf16.mxu0 0
    %392 = vmatpush1.bf16.msra.mxu0 %v297
    %393 = vmatprep.subr.bf16.mxu0 0
    %394 = vmatpush1.bf16.msra.mxu0 %v300
    %395 = vmatprep.subr.bf16.mxu0 0
    %396 = vmatpush1.bf16.msra.mxu0 %v303
    %397 = vmatprep.subr.bf16.mxu0 0
    %398 = vmatpush1.bf16.msra.mxu0 0
    %399 = vmatprep.subr.bf16.mxu0 0
    %400 = vmatpush1.bf16.msra.mxu0 0
    %401 = vmatprep.subr.bf16.mxu0 0
    %402 = vmatpush1.bf16.msra.mxu0 0
    %403 = vmatprep.subr.bf16.mxu0 0
    %404 = vmatpush1.bf16.msra.mxu0 0
    %405 = vmatprep.subr.bf16.mxu0 0
    %406 = vmatpush1.bf16.msra.mxu0 0
    %407 = vmatprep.subr.bf16.mxu0 0
    %408 = vmatpush1.bf16.msra.mxu0 0
    %409 = vmatprep.subr.bf16.mxu0 0
    %410 = vmatpush1.bf16.msra.mxu0 0
    %411 = vmatprep.subr.bf16.mxu0 0
    %412 = vmatpush1.bf16.msra.mxu0 0
    %413 = vmatprep.mubr.bf16.mxu0 0
    %414 = vmatmul.mubr.bf16.gmra.mrb[0].mxu0 %v149
    %v415 = vpop.f32.mrb[0].mxu0
    %v416 = vadd.f32 %v196, %v415
    %v417 = vpop.f32.mrb[0].mxu0
    %v418 = vpop.f32.mrb[0].mxu0
    %v419 = vadd.f32 %v196, %v418
    %v420 = vpop.f32.mrb[0].mxu0
    %421 = vmatprep.mubr.bf16.mxu0 0
    %422 = vmatmul.mubr.bf16.gmra.mrb[0].mxu0 %v150
    %v423 = vpop.f32.mrb[0].mxu0
    %v424 = vadd.f32 %v196, %v423
    %v425 = vpop.f32.mrb[0].mxu0
    %v426 = vpop.f32.mrb[0].mxu0
    %v427 = vadd.f32 %v196, %v426
    %v428 = vpop.f32.mrb[0].mxu0
    %429 = vdwg.mxu0
    %430 = vst [vmem:[#allocation7] sm:$0xff] %v363
    %431 = vst [vmem:[#allocation7 + $0x8] sm:$0xff] %v365
    %432 = vst [vmem:[#allocation7 + $0x10] sm:$0xff] %v416
    %433 = vst [vmem:[#allocation7 + $0x18] sm:$0xff] %v367
    %434 = vst [vmem:[#allocation7 + $0x20] sm:$0xff] %v369
    %435 = vst [vmem:[#allocation7 + $0x28] sm:$0xff] %v419
    %436 = vst [vmem:[#allocation7 + $0x30] sm:$0xff] %v373
    %437 = vst [vmem:[#allocation7 + $0x38] sm:$0xff] %v375
    %438 = vst [vmem:[#allocation7 + $0x40] sm:$0xff] %v424
    %439 = vst [vmem:[#allocation7 + $0x48] sm:$0xff] %v377
    %440 = vst [vmem:[#allocation7 + $0x50] sm:$0xff] %v379
    %441 = vst [vmem:[#allocation7 + $0x58] sm:$0xff] %v427
    // Predicated region
    $region30: #{tpu_custom_call.1} parent=1 // pred_check
      _
    $region31: #{tpu_custom_call.1} parent=1 // pred_check_branch
      %443 = sbr.rel (0) target = $region33
    $region32: #{tpu_custom_call.1} parent=1 // pred_region
      %s445 = ssub.s32 1536, 1536
      %446 = vsyncadd [#allocation4], %s445
      %s447 = sshll.u32 [#allocation7], 4
      %s448 = int_to_ptr.vmem [resolvable:$true] %s447
      %453 = dma.vmem_to_hbm [thread:$0]  %s448, 1536, %s5, [#allocation4], 384, 384, 24
    $region33: #{tpu_custom_call.1} parent=1 // pred_fallthru
      _
    // Predicated region
    $region34: #{tpu_custom_call.1} parent=1 // pred_check
      _
    $region35: #{tpu_custom_call.1} parent=1 // pred_check_branch
      %455 = sbr.rel (0) target = $region37
    $region36: #{tpu_custom_call.1} parent=1 // pred_region
      %456 = dma.done [#allocation4], 1536
    $region37: #{tpu_custom_call.1} parent=1 // pred_fallthru
      _
    %457 = vsyncpa [#allocation3], 1
    %458 = vsyncpa [#allocation6], 1
    %459 = vsyncpa [#allocation4], 1

</llo_original>
